<compile_context>
chip_gen: v7x
topology: tpu7x:2x2x1
jax: 0.10.0
libtpu: 0.0.40
codegen_flags: <defaults>
</compile_context>

<pallas_src>
import jax
import jax.numpy as jnp
from jax.experimental import pallas as pl
from jax.experimental.pallas import tpu as pltpu

LANE = 128


def _round_up(n, m):
    return ((n + m - 1) // m) * m


def mlp_kernel(xt_ref, w1_ref, b1_ref, w2_ref, b2_ref, w3_ref, b3_ref, o_ref):
    # xt_ref: (IN, TILE_B) f32 — batch already on the lane axis (no transpose).
    # Cast the streamed tile to the matmul dtype in-kernel (no extra HBM pass).
    xt = xt_ref[...].astype(w1_ref.dtype)                              # (IN, TILE_B)

    # Layer 1: Linear + ReLU.  K = IN is tiny, but the MXU has huge slack in
    # this kernel, so keeping it there frees the VPU for bias/ReLU work.
    h1 = jnp.dot(w1_ref[...], xt, preferred_element_type=jnp.float32)  # (H, TILE_B) f32
    h1 = jnp.maximum(h1 + b1_ref[...], 0.0)                            # f32 VPU math

    # Layer 2: Linear + ReLU (H x H MXU matmul, bf16 operands, f32 accumulate).
    h2 = jnp.dot(w2_ref[...], h1.astype(w2_ref.dtype),
                 preferred_element_type=jnp.float32)                   # (H, TILE_B) f32
    h2 = jnp.maximum(h2 + b2_ref[...], 0.0)

    # Layer 3: out_features == 1 -> f32 VPU multiply + sublane reduce (no N=1
    # MXU matmul).  b3 is a scalar read from SMEM.
    out = jnp.sum(h2 * w3_ref[...], axis=0, keepdims=True) + b3_ref[0, 0]  # (1, TILE_B)
    o_ref[...] = out.astype(o_ref.dtype)


def mlp_forward(x, params, *, tile_b=8192, compute_dtype=jnp.bfloat16):
    """x: (B, input_num) float32.  Returns (B, 1) float32.

    params layout (PyTorch nn.Linear weight layout for w1/w2, w3 transposed):
      w1: (hidden, input)   b1: (hidden, 1)
      w2: (hidden, hidden)  b2: (hidden, 1)
      w3: (hidden, 1)       b3: (1, 1)
    NOTE: w3 here is the transpose of PyTorch's (1, hidden) nn.Linear weight.
    With the default compute_dtype=bfloat16, matmul inputs are bf16 (f32
    accumulate): expect ~1e-3-level absolute error vs a pure-f32 reference.
    """
    B, in_dim = x.shape
    hidden = params["w1"].shape[0]

    # Matmul operands in compute_dtype (bf16 default); VPU-side params stay f32.
    w1 = params["w1"].astype(compute_dtype)
    w2 = params["w2"].astype(compute_dtype)
    w3 = params["w3"].astype(jnp.float32)          # layer-3 VPU multiply stays f32
    b1 = params["b1"].astype(jnp.float32)
    b2 = params["b2"].astype(jnp.float32)
    b3 = params["b3"].astype(jnp.float32)

    # One-time wrapper-side transpose: batch goes on the lane axis so the x
    # tile is lane-dense and the output tile is (1, tile_b).
    xt = x.astype(jnp.float32).T                   # (in_dim, B), streamed as f32

    # Tile sizing: lane-aligned; cap so the batch grid has >=4 steps (v7x
    # megacore split) while keeping each step >= 512 rows to amortize the
    # ~0.35us per-step overhead.
    bl = _round_up(B, LANE)
    tile_b = min(tile_b, max(512, _round_up(pl.cdiv(bl, 4), LANE)))
    tile_b = max(LANE, _round_up(tile_b, LANE))
    bp = _round_up(B, tile_b)
    if bp != B:
        xt = jnp.pad(xt, ((0, 0), (0, bp - B)))
    grid = (bp // tile_b,)

    w_itemsize = jnp.dtype(compute_dtype).itemsize
    cost = pl.CostEstimate(
        flops=2 * bp * (in_dim * hidden + hidden * hidden + hidden),
        transcendentals=0,
        bytes_accessed=(bp * in_dim * 4                       # x stream (f32)
                        + bp * 4                              # output stream (f32)
                        + (w1.size + w2.size) * w_itemsize
                        + (w3.size + b1.size + b2.size + b3.size) * 4),
    )

    resident = lambda arr: pl.BlockSpec(arr.shape, lambda i: (0, 0))

    out2d = pl.pallas_call(
        mlp_kernel,
        out_shape=jax.ShapeDtypeStruct((1, bp), jnp.float32),
        grid=grid,
        in_specs=[
            pl.BlockSpec((in_dim, tile_b), lambda i: (0, i)),   # x^T: streamed, lane-dense
            resident(w1), resident(b1),                         # VMEM-resident params
            resident(w2), resident(b2),
            resident(w3),
            pl.BlockSpec(memory_space=pltpu.MemorySpace.SMEM),  # b3: scalar in SMEM
        ],
        out_specs=pl.BlockSpec((1, tile_b), lambda i: (0, i)),  # lane-dense output tile
        compiler_params=pltpu.CompilerParams(
            dimension_semantics=("parallel",),
            vmem_limit_bytes=32 * 1024 * 1024,
        ),
        cost_estimate=cost,
    )(xt, w1, b1, w2, b2, w3, b3)

    return out2d[0, :B].reshape(B, 1)


def _xavier_uniform(key, shape, fan_in, fan_out, dtype=jnp.float32):
    # Matches torch.nn.init.xavier_uniform_ (gain=1): U(-a, a), a=sqrt(6/(fan_in+fan_out))
    limit = (6.0 / (fan_in + fan_out)) ** 0.5
    return jax.random.uniform(key, shape, dtype, minval=-limit, maxval=limit)


def init_mlp_params(key, input_num=4, hidden_num=64):
    k1, k2, k3 = jax.random.split(key, 3)
    return {
        "w1": _xavier_uniform(k1, (hidden_num, input_num), input_num, hidden_num),
        "b1": jnp.zeros((hidden_num, 1), jnp.float32),
        "w2": _xavier_uniform(k2, (hidden_num, hidden_num), hidden_num, hidden_num),
        "b2": jnp.zeros((hidden_num, 1), jnp.float32),
        # NOTE: transposed vs PyTorch's (1, hidden) layout — transpose when
        # loading a real torch checkpoint.
        "w3": _xavier_uniform(k3, (hidden_num, 1), hidden_num, 1),
        "b3": jnp.zeros((1, 1), jnp.float32),
    }


def mlp_reference(x, p):
    h1 = jnp.maximum(x @ p["w1"].T + p["b1"][:, 0], 0.0)
    h2 = jnp.maximum(h1 @ p["w2"].T + p["b2"][:, 0], 0.0)
    return h2 @ p["w3"] + p["b3"][0]


if __name__ == "__main__":
    key = jax.random.PRNGKey(0)
    kx, kp = jax.random.split(key)

    input_num, hidden_num = 4, 64
    params = init_mlp_params(kp, input_num, hidden_num)

    # Case 1: f32 compute path (exact vs reference), small batch, single tile.
    batch = 8
    x = jax.random.normal(kx, (batch, input_num), jnp.float32)
    out = jax.block_until_ready(mlp_forward(x, params, compute_dtype=jnp.float32))
    ref = mlp_reference(x, params)
    assert out.shape == (batch, 1)
    assert jnp.allclose(out, ref, atol=1e-4, rtol=1e-4), "mismatch vs reference (f32, single tile)"

    # Case 2: default bf16 matmul path, non-multiple batch + multi-step grid
    # (exercises padding, pipelined x/out tiles and VMEM-resident weights).
    batch2 = 300
    x2 = jax.random.normal(jax.random.PRNGKey(1), (batch2, input_num), jnp.float32)
    out2 = jax.block_until_ready(mlp_forward(x2, params, tile_b=128))
    ref2 = mlp_reference(x2, params)
    assert out2.shape == (batch2, 1)
    assert jnp.allclose(out2, ref2, atol=2e-2, rtol=2e-2), "mismatch vs reference (bf16, gridded)"

    # Case 3: default tile sizing on a small batch (padded single tile, bf16).
    out3 = jax.block_until_ready(mlp_forward(x, params))
    assert out3.shape == (batch, 1)
    assert jnp.allclose(out3, ref, atol=2e-2, rtol=2e-2), "mismatch vs reference (bf16, default tile)"

    print("KERNEL_OK")
</pallas_src>

<mosaic_0001>
module attributes {stable_mosaic.version = 11 : i64} {
  func.func @mlp_kernel(%arg0: i32, %arg1: memref<4x512xf32, #tpu.memory_space<vmem>>, %arg2: memref<64x4xf32, #tpu.memory_space<vmem>>, %arg3: memref<64x1xf32, #tpu.memory_space<vmem>>, %arg4: memref<64x64xf32, #tpu.memory_space<vmem>>, %arg5: memref<64x1xf32, #tpu.memory_space<vmem>>, %arg6: memref<64x1xf32, #tpu.memory_space<vmem>>, %arg7: memref<1x1xf32, #tpu.memory_space<smem>>, %arg8: memref<1x512xf32, #tpu.memory_space<vmem>>) attributes {dimension_semantics = [#tpu.dimension_semantics<parallel>], iteration_bounds = array<i64: 1>, scalar_prefetch = 0 : i64, scratch_operands = 0 : i64, tpu.core_type = #tpu.core_type<tc>, window_params = [{transform_indices = @transform_0, window_bounds = array<i64: 4, 512>}, {pipeline_mode = #tpu.pipeline_mode<synchronous>, transform_indices = @transform_1, window_bounds = array<i64: 64, 4>}, {pipeline_mode = #tpu.pipeline_mode<synchronous>, transform_indices = @transform_2, window_bounds = array<i64: 64, 1>}, {pipeline_mode = #tpu.pipeline_mode<synchronous>, transform_indices = @transform_3, window_bounds = array<i64: 64, 64>}, {pipeline_mode = #tpu.pipeline_mode<synchronous>, transform_indices = @transform_4, window_bounds = array<i64: 64, 1>}, {pipeline_mode = #tpu.pipeline_mode<synchronous>, transform_indices = @transform_5, window_bounds = array<i64: 64, 1>}, {transform_indices = @transform_6, window_bounds = array<i64: 1, 1>}, {transform_indices = @transform_7, window_bounds = array<i64: 1, 512>}]} {
    %c0 = arith.constant 0 : index
    %c0_0 = arith.constant 0 : index
    %0 = vector.load %arg1[%c0, %c0_0] : memref<4x512xf32, #tpu.memory_space<vmem>>, vector<4x512xf32>
    %c0_1 = arith.constant 0 : index
    %c0_2 = arith.constant 0 : index
    %1 = vector.load %arg2[%c0_1, %c0_2] : memref<64x4xf32, #tpu.memory_space<vmem>>, vector<64x4xf32>
    %cst = arith.constant dense<0.000000e+00> : vector<64x512xf32>
    %2 = tpu.matmul %1, %0, %cst {dimension_numbers = #tpu.dot_dimension_numbers<[1], [0], [0], [1], [0, 0, 1, 1], [], []>} : vector<64x4xf32>, vector<4x512xf32>, vector<64x512xf32> -> vector<64x512xf32>
    %c0_3 = arith.constant 0 : index
    %c0_4 = arith.constant 0 : index
    %3 = vector.load %arg3[%c0_3, %c0_4] : memref<64x1xf32, #tpu.memory_space<vmem>>, vector<64x1xf32>
    %4 = vector.broadcast %3 : vector<64x1xf32> to vector<64x512xf32>
    %5 = arith.addf %2, %4 : vector<64x512xf32>
    %cst_5 = arith.constant 0.000000e+00 : f32
    %6 = vector.broadcast %cst_5 : f32 to vector<64x512xf32>
    %7 = arith.maximumf %5, %6 : vector<64x512xf32>
    %c0_6 = arith.constant 0 : index
    %c0_7 = arith.constant 0 : index
    %8 = vector.load %arg4[%c0_6, %c0_7] : memref<64x64xf32, #tpu.memory_space<vmem>>, vector<64x64xf32>
    %cst_8 = arith.constant dense<0.000000e+00> : vector<64x512xf32>
    %9 = tpu.matmul %8, %7, %cst_8 {dimension_numbers = #tpu.dot_dimension_numbers<[1], [0], [0], [1], [0, 0, 1, 1], [], []>} : vector<64x64xf32>, vector<64x512xf32>, vector<64x512xf32> -> vector<64x512xf32>
    %c0_9 = arith.constant 0 : index
    %c0_10 = arith.constant 0 : index
    %10 = vector.load %arg5[%c0_9, %c0_10] : memref<64x1xf32, #tpu.memory_space<vmem>>, vector<64x1xf32>
    %11 = vector.broadcast %10 : vector<64x1xf32> to vector<64x512xf32>
    %12 = arith.addf %9, %11 : vector<64x512xf32>
    %cst_11 = arith.constant 0.000000e+00 : f32
    %13 = vector.broadcast %cst_11 : f32 to vector<64x512xf32>
    %14 = arith.maximumf %12, %13 : vector<64x512xf32>
    %c0_12 = arith.constant 0 : index
    %c0_13 = arith.constant 0 : index
    %15 = vector.load %arg6[%c0_12, %c0_13] : memref<64x1xf32, #tpu.memory_space<vmem>>, vector<64x1xf32>
    %16 = vector.broadcast %15 : vector<64x1xf32> to vector<64x512xf32>
    %17 = arith.mulf %14, %16 : vector<64x512xf32>
    %cst_14 = arith.constant dense<0.000000e+00> : vector<512xf32>
    %18 = vector.multi_reduction <add>, %17, %cst_14 [0] : vector<64x512xf32> to vector<512xf32>
    %19 = vector.shape_cast %18 : vector<512xf32> to vector<1x512xf32>
    %c0_15 = arith.constant 0 : index
    %c0_16 = arith.constant 0 : index
    %20 = memref.load %arg7[%c0_15, %c0_16] : memref<1x1xf32, #tpu.memory_space<smem>>
    %21 = vector.broadcast %20 : f32 to vector<1x512xf32>
    %22 = arith.addf %19, %21 : vector<1x512xf32>
    %c0_17 = arith.constant 0 : index
    %c0_18 = arith.constant 0 : index
    %23 = vector.load %arg8[%c0_17, %c0_18] : memref<1x512xf32, #tpu.memory_space<vmem>>, vector<1x512xf32>
    tpu.vector_store %arg8[%c0_17, %c0_18], %22 {strides = array<i32>} : memref<1x512xf32, #tpu.memory_space<vmem>>, vector<1x512xf32>,
    return
  }
  func.func @transform_0(%arg0: i32) -> (i32, i32) {
    %c0_i32 = arith.constant 0 : i32
    %c0_i32_0 = arith.constant 0 : i32
    return %c0_i32, %arg0 : i32, i32
  }
  func.func @transform_1(%arg0: i32) -> (i32, i32) {
    %c0_i32 = arith.constant 0 : i32
    %c0_i32_0 = arith.constant 0 : i32
    %c0_i32_1 = arith.constant 0 : i32
    return %c0_i32, %c0_i32_0 : i32, i32
  }
  func.func @transform_2(%arg0: i32) -> (i32, i32) {
    %c0_i32 = arith.constant 0 : i32
    %c0_i32_0 = arith.constant 0 : i32
    %c0_i32_1 = arith.constant 0 : i32
    return %c0_i32, %c0_i32_0 : i32, i32
  }
  func.func @transform_3(%arg0: i32) -> (i32, i32) {
    %c0_i32 = arith.constant 0 : i32
    %c0_i32_0 = arith.constant 0 : i32
    %c0_i32_1 = arith.constant 0 : i32
    return %c0_i32, %c0_i32_0 : i32, i32
  }
  func.func @transform_4(%arg0: i32) -> (i32, i32) {
    %c0_i32 = arith.constant 0 : i32
    %c0_i32_0 = arith.constant 0 : i32
    %c0_i32_1 = arith.constant 0 : i32
    return %c0_i32, %c0_i32_0 : i32, i32
  }
  func.func @transform_5(%arg0: i32) -> (i32, i32) {
    %c0_i32 = arith.constant 0 : i32
    %c0_i32_0 = arith.constant 0 : i32
    %c0_i32_1 = arith.constant 0 : i32
    return %c0_i32, %c0_i32_0 : i32, i32
  }
  func.func @transform_6(%arg0: i32) -> (i32, i32) {
    %c0_i32 = arith.constant 0 : i32
    %c0_i32_0 = arith.constant 0 : i32
    %c0_i32_1 = arith.constant 0 : i32
    return %c0_i32, %c0_i32_0 : i32, i32
  }
  func.func @transform_7(%arg0: i32) -> (i32, i32) {
    %c0_i32 = arith.constant 0 : i32
    %c0_i32_0 = arith.constant 0 : i32
    return %c0_i32, %arg0 : i32, i32
  }
}

</mosaic_0001>

<llo_original>
// kernel: tpu_custom_call.1
$region0: #{tpu_custom_call.1}
  #allocation0 [shape = 'u32[]', space=smem, size = 0x4, offset = 0x4, fixed_abs, tag = 'smem constant byte address 0x4 - core index']
  #allocation1 [shape = 'u32[144,128]{1,0:T(1,128)}', space=vmem, size = 0x12000, scoped, tag = 'internal scratch']
  #allocation2 [shape = 'f32[1,1]{1,0:T(1,128)S(6)}', space=smem, size = 0x200, scoped, tag = 'scoped memory for tpu_custom_call.1']
  %s0 = inlined_call_operand.vmem [shape: f32[4,512], index: 0, kind: input, shape index: {}]
  %s1 = inlined_call_operand.vmem [shape: f32[64,4], index: 1, kind: input, shape index: {}]
  %s2 = inlined_call_operand.vmem [shape: f32[64,1], index: 2, kind: input, shape index: {}]
  %s3 = inlined_call_operand.vmem [shape: f32[64,64], index: 3, kind: input, shape index: {}]
  %s4 = inlined_call_operand.vmem [shape: f32[64,1], index: 4, kind: input, shape index: {}]
  %s5 = inlined_call_operand.vmem [shape: f32[64,1], index: 5, kind: input, shape index: {}]
  %s6 = inlined_call_operand.<no memory space> [shape: f32[1,1], index: 6, kind: input, shape index: {}]
  %s7 = inlined_call_operand.hbm [shape: f32[1,512], index: 7, kind: output, shape index: {}]
  %s8 = sld [smem:[#allocation0]]
  $region38: #{tpu_custom_call.1} parent=0
    _
  %s10 = ssub.s32 1, %s8
  %s11 = scalar_select 0, %s10, %s8
  %12 = sst [smem:[#allocation2]] %s6
  $region1: #{tpu_custom_call.1} parent=0
    #allocation3 [shape = 'u8[2048]{0}', space=vmem, size = 0x800, scoped, tag = 'output window, operand 0, single buffered']
    #allocation4 [shape = 's32[1]{0}', space=sflag, size = 0x4, scoped, tag = 'scoped memory for tpu_custom_call.1']
    %13 = vsyncpa [#allocation4], 0
    // Predicated region
    $region2: #{tpu_custom_call.1} parent=1 // pred_check
      _
    $region3: #{tpu_custom_call.1} parent=1 // pred_check_branch
      %15 = sbr.rel (0) target = $region5
    $region4: #{tpu_custom_call.1} parent=1 // pred_region
      _
    $region5: #{tpu_custom_call.1} parent=1 // pred_fallthru
      _
    // Predicated region
    $region6: #{tpu_custom_call.1} parent=1 // pred_check
      _
    $region7: #{tpu_custom_call.1} parent=1 // pred_check_branch
      %17 = sbr.rel (0) target = $region9
    $region8: #{tpu_custom_call.1} parent=1 // pred_region
      _
    $region9: #{tpu_custom_call.1} parent=1 // pred_fallthru
      _
    // Predicated region
    $region10: #{tpu_custom_call.1} parent=1 // pred_check
      _
    $region11: #{tpu_custom_call.1} parent=1 // pred_check_branch
      %19 = sbr.rel (0) target = $region13
    $region12: #{tpu_custom_call.1} parent=1 // pred_region
      _
    $region13: #{tpu_custom_call.1} parent=1 // pred_fallthru
      _
    // Predicated region
    $region14: #{tpu_custom_call.1} parent=1 // pred_check
      _
    $region15: #{tpu_custom_call.1} parent=1 // pred_check_branch
      %21 = sbr.rel (0) target = $region17
    $region16: #{tpu_custom_call.1} parent=1 // pred_region
      _
    $region17: #{tpu_custom_call.1} parent=1 // pred_fallthru
      _
    // Predicated region
    $region18: #{tpu_custom_call.1} parent=1 // pred_check
      _
    $region19: #{tpu_custom_call.1} parent=1 // pred_check_branch
      %23 = sbr.rel (0) target = $region21
    $region20: #{tpu_custom_call.1} parent=1 // pred_region
      _
    $region21: #{tpu_custom_call.1} parent=1 // pred_fallthru
      _
    // Predicated region
    $region22: #{tpu_custom_call.1} parent=1 // pred_check
      _
    $region23: #{tpu_custom_call.1} parent=1 // pred_check_branch
      %25 = sbr.rel (0) target = $region25
    $region24: #{tpu_custom_call.1} parent=1 // pred_region
      _
    $region25: #{tpu_custom_call.1} parent=1 // pred_fallthru
      _
    // Predicated region
    $region26: #{tpu_custom_call.1} parent=1 // pred_check
      _
    $region27: #{tpu_custom_call.1} parent=1 // pred_check_branch
      %27 = sbr.rel (0) target = $region29
    $region28: #{tpu_custom_call.1} parent=1 // pred_region
      _
    $region29: #{tpu_custom_call.1} parent=1 // pred_fallthru
      _
    %v28 = vld [vmem:[%s0] sm:$0xff]
    %v29 = vld [vmem:[%s0 + $0x8] sm:$0xff]
    %v30 = vld [vmem:[%s1] sm:$0xff]
    %v31 = vld [vmem:[%s1 + $0x8] sm:$0xff]
    %v32 = vld [vmem:[%s1 + $0x10] sm:$0xff]
    %v33 = vld [vmem:[%s1 + $0x18] sm:$0xff]
    %v34 = vld [vmem:[%s1 + $0x20] sm:$0xff]
    %v35 = vld [vmem:[%s1 + $0x28] sm:$0xff]
    %v36 = vld [vmem:[%s1 + $0x30] sm:$0xff]
    %v37 = vld [vmem:[%s1 + $0x38] sm:$0xff]
    %v38 = vld [vmem:[%s2] sm:$0xff]
    %v39 = vld [vmem:[%s2 + $0x8] sm:$0xff]
    %v40 = vld [vmem:[%s2 + $0x10] sm:$0xff]
    %v41 = vld [vmem:[%s2 + $0x18] sm:$0xff]
    %v42 = vld [vmem:[%s2 + $0x20] sm:$0xff]
    %v43 = vld [vmem:[%s2 + $0x28] sm:$0xff]
    %v44 = vld [vmem:[%s2 + $0x30] sm:$0xff]
    %v45 = vld [vmem:[%s2 + $0x38] sm:$0xff]
    %47 = vset.pattern.permute.xlu0 0
    %48 = vperm.xlu0 %47, %v38
    %v49 = vpop.permute.xlu0 %48
    %52 = vset.pattern.permute.xlu0 0
    %53 = vperm.xlu0 %52, %v39
    %v54 = vpop.permute.xlu0 %53
    %57 = vset.pattern.permute.xlu0 0
    %58 = vperm.xlu0 %57, %v40
    %v59 = vpop.permute.xlu0 %58
    %62 = vset.pattern.permute.xlu0 0
    %63 = vperm.xlu0 %62, %v41
    %v64 = vpop.permute.xlu0 %63
    %67 = vset.pattern.permute.xlu0 0
    %68 = vperm.xlu0 %67, %v42
    %v69 = vpop.permute.xlu0 %68
    %72 = vset.pattern.permute.xlu0 0
    %73 = vperm.xlu0 %72, %v43
    %v74 = vpop.permute.xlu0 %73
    %77 = vset.pattern.permute.xlu0 0
    %78 = vperm.xlu0 %77, %v44
    %v79 = vpop.permute.xlu0 %78
    %82 = vset.pattern.permute.xlu0 0
    %83 = vperm.xlu0 %82, %v45
    %v84 = vpop.permute.xlu0 %83
    %v88 = vcombine.high %v28, %v28
    %v89 = vcombine.high %v29, %v29
    %vm90 = vcmask 31744
    %v92 = vsel %vm90, %v30, 0
    %v95 = vsel %vm90, %v31, 0
    %v98 = vsel %vm90, %v32, 0
    %v101 = vsel %vm90, %v33, 0
    %v104 = vsel %vm90, %v34, 0
    %v107 = vsel %vm90, %v35, 0
    %v110 = vsel %vm90, %v36, 0
    %v113 = vsel %vm90, %v37, 0
    %vm115 = vcmask 1043456
    %v116 = vsel %vm115, %v28, 0
    %v118 = vsel %vm115, %v88, 0
    %v120 = vsel %vm115, %v29, 0
    %v122 = vsel %vm115, %v89, 0
    %124 = vmatprep.subr.mxu0 %v118
    %125 = vmatpush1.msra.mxu0 %v116
    %126 = vmatprep.subr.mxu0 0.0
    %127 = vmatpush1.msra.mxu0 0.0
    %128 = vmatprep.subr.mxu0 0.0
    %129 = vmatpush1.msra.mxu0 0.0
    %130 = vmatprep.subr.mxu0 0.0
    %131 = vmatpush1.msra.mxu0 0.0
    %132 = vmatprep.subr.mxu0 0.0
    %133 = vmatpush1.msra.mxu0 0.0
    %134 = vmatprep.subr.mxu0 0.0
    %135 = vmatpush1.msra.mxu0 0.0
    %136 = vmatprep.subr.mxu0 0.0
    %137 = vmatpush1.msra.mxu0 0.0
    %138 = vmatprep.subr.mxu0 0.0
    %139 = vmatpush1.msra.mxu0 0.0
    %140 = vmatprep.subr.mxu0 0.0
    %141 = vmatpush1.msra.mxu0 0.0
    %142 = vmatprep.subr.mxu0 0.0
    %143 = vmatpush1.msra.mxu0 0.0
    %144 = vmatprep.subr.mxu0 0.0
    %145 = vmatpush1.msra.mxu0 0.0
    %146 = vmatprep.subr.mxu0 0.0
    %147 = vmatpush1.msra.mxu0 0.0
    %148 = vmatprep.subr.mxu0 0.0
    %149 = vmatpush1.msra.mxu0 0.0
    %150 = vmatprep.subr.mxu0 0.0
    %151 = vmatpush1.msra.mxu0 0.0
    %152 = vmatprep.subr.mxu0 0.0
    %153 = vmatpush1.msra.mxu0 0.0
    %154 = vmatprep.subr.mxu0 0.0
    %155 = vmatpush1.msra.mxu0 0.0
    %156 = vmatprep.subr.mxu0 0.0
    %157 = vmatpush1.msra.mxu0 0.0
    %158 = vmatprep.subr.mxu0 0.0
    %159 = vmatpush1.msra.mxu0 0.0
    %160 = vmatprep.subr.mxu0 0.0
    %161 = vmatpush1.msra.mxu0 0.0
    %162 = vmatprep.subr.mxu0 0.0
    %163 = vmatpush1.msra.mxu0 0.0
    %164 = vmatprep.subr.mxu0 0.0
    %165 = vmatpush1.msra.mxu0 0.0
    %166 = vmatprep.subr.mxu0 0.0
    %167 = vmatpush1.msra.mxu0 0.0
    %168 = vmatprep.subr.mxu0 0.0
    %169 = vmatpush1.msra.mxu0 0.0
    %170 = vmatprep.subr.mxu0 0.0
    %171 = vmatpush1.msra.mxu0 0.0
    %172 = vmatprep.subr.mxu0 0.0
    %173 = vmatpush1.msra.mxu0 0.0
    %174 = vmatprep.subr.mxu0 0.0
    %175 = vmatpush1.msra.mxu0 0.0
    %176 = vmatprep.subr.mxu0 0.0
    %177 = vmatpush1.msra.mxu0 0.0
    %178 = vmatprep.subr.mxu0 0.0
    %179 = vmatpush1.msra.mxu0 0.0
    %180 = vmatprep.subr.mxu0 0.0
    %181 = vmatpush1.msra.mxu0 0.0
    %182 = vmatprep.subr.mxu0 0.0
    %183 = vmatpush1.msra.mxu0 0.0
    %184 = vmatprep.subr.mxu0 0.0
    %185 = vmatpush1.msra.mxu0 0.0
    %186 = vmatprep.subr.mxu0 0.0
    %187 = vmatpush1.msra.mxu0 0.0
    %188 = vmatprep.mubr.f32.mxu0 0.0
    %189 = vmatmul.mubr.f32.gmra.mrb[0].mxu0 %v92
    %v190 = vpop.f32.mrb[0].mxu0
    %v191 = vadd.f32 %v49, %v190
    %v192 = vpop.f32.mrb[0].mxu0
    %v193 = vadd.f32 %v49, %v192
    %194 = vmatprep.mubr.f32.mxu0 0.0
    %195 = vmatmul.mubr.f32.gmra.mrb[0].mxu0 %v95
    %v196 = vpop.f32.mrb[0].mxu0
    %v197 = vadd.f32 %v54, %v196
    %v198 = vpop.f32.mrb[0].mxu0
    %v199 = vadd.f32 %v54, %v198
    %200 = vmatprep.mubr.f32.mxu0 0.0
    %201 = vmatmul.mubr.f32.gmra.mrb[0].mxu0 %v98
    %v202 = vpop.f32.mrb[0].mxu0
    %v203 = vadd.f32 %v59, %v202
    %v204 = vpop.f32.mrb[0].mxu0
    %v205 = vadd.f32 %v59, %v204
    %206 = vmatprep.mubr.f32.mxu0 0.0
    %207 = vmatmul.mubr.f32.gmra.mrb[0].mxu0 %v101
    %v208 = vpop.f32.mrb[0].mxu0
    %v209 = vadd.f32 %v64, %v208
    %v210 = vpop.f32.mrb[0].mxu0
    %v211 = vadd.f32 %v64, %v210
    %212 = vmatprep.mubr.f32.mxu0 0.0
    %213 = vmatmul.mubr.f32.gmra.mrb[0].mxu0 %v104
    %v214 = vpop.f32.mrb[0].mxu0
    %v215 = vadd.f32 %v69, %v214
    %v216 = vpop.f32.mrb[0].mxu0
    %v217 = vadd.f32 %v69, %v216
    %218 = vmatprep.mubr.f32.mxu0 0.0
    %219 = vmatmul.mubr.f32.gmra.mrb[0].mxu0 %v107
    %v220 = vpop.f32.mrb[0].mxu0
    %v221 = vadd.f32 %v74, %v220
    %v222 = vpop.f32.mrb[0].mxu0
    %v223 = vadd.f32 %v74, %v222
    %224 = vmatprep.mubr.f32.mxu0 0.0
    %225 = vmatmul.mubr.f32.gmra.mrb[0].mxu0 %v110
    %v226 = vpop.f32.mrb[0].mxu0
    %v227 = vadd.f32 %v79, %v226
    %v228 = vpop.f32.mrb[0].mxu0
    %v229 = vadd.f32 %v79, %v228
    %230 = vmatprep.mubr.f32.mxu0 0.0
    %231 = vmatmul.mubr.f32.gmra.mrb[0].mxu0 %v113
    %v232 = vpop.f32.mrb[0].mxu0
    %v233 = vadd.f32 %v84, %v232
    %v234 = vpop.f32.mrb[0].mxu0
    %v235 = vadd.f32 %v84, %v234
    %236 = vdwg.mxu0
    %237 = vmatprep.subr.mxu0 %v122
    %238 = vmatpush1.msra.mxu0 %v120
    %239 = vmatprep.subr.mxu0 0.0
    %240 = vmatpush1.msra.mxu0 0.0
    %241 = vmatprep.subr.mxu0 0.0
    %242 = vmatpush1.msra.mxu0 0.0
    %243 = vmatprep.subr.mxu0 0.0
    %244 = vmatpush1.msra.mxu0 0.0
    %245 = vmatprep.subr.mxu0 0.0
    %246 = vmatpush1.msra.mxu0 0.0
    %247 = vmatprep.subr.mxu0 0.0
    %248 = vmatpush1.msra.mxu0 0.0
    %249 = vmatprep.subr.mxu0 0.0
    %250 = vmatpush1.msra.mxu0 0.0
    %251 = vmatprep.subr.mxu0 0.0
    %252 = vmatpush1.msra.mxu0 0.0
    %253 = vmatprep.subr.mxu0 0.0
    %254 = vmatpush1.msra.mxu0 0.0
    %255 = vmatprep.subr.mxu0 0.0
    %256 = vmatpush1.msra.mxu0 0.0
    %257 = vmatprep.subr.mxu0 0.0
    %258 = vmatpush1.msra.mxu0 0.0
    %259 = vmatprep.subr.mxu0 0.0
    %260 = vmatpush1.msra.mxu0 0.0
    %261 = vmatprep.subr.mxu0 0.0
    %262 = vmatpush1.msra.mxu0 0.0
    %263 = vmatprep.subr.mxu0 0.0
    %264 = vmatpush1.msra.mxu0 0.0
    %265 = vmatprep.subr.mxu0 0.0
    %266 = vmatpush1.msra.mxu0 0.0
    %267 = vmatprep.subr.mxu0 0.0
    %268 = vmatpush1.msra.mxu0 0.0
    %269 = vmatprep.subr.mxu0 0.0
    %270 = vmatpush1.msra.mxu0 0.0
    %271 = vmatprep.subr.mxu0 0.0
    %272 = vmatpush1.msra.mxu0 0.0
    %273 = vmatprep.subr.mxu0 0.0
    %274 = vmatpush1.msra.mxu0 0.0
    %275 = vmatprep.subr.mxu0 0.0
    %276 = vmatpush1.msra.mxu0 0.0
    %277 = vmatprep.subr.mxu0 0.0
    %278 = vmatpush1.msra.mxu0 0.0
    %279 = vmatprep.subr.mxu0 0.0
    %280 = vmatpush1.msra.mxu0 0.0
    %281 = vmatprep.subr.mxu0 0.0
    %282 = vmatpush1.msra.mxu0 0.0
    %283 = vmatprep.subr.mxu0 0.0
    %284 = vmatpush1.msra.mxu0 0.0
    %285 = vmatprep.subr.mxu0 0.0
    %286 = vmatpush1.msra.mxu0 0.0
    %287 = vmatprep.subr.mxu0 0.0
    %288 = vmatpush1.msra.mxu0 0.0
    %289 = vmatprep.subr.mxu0 0.0
    %290 = vmatpush1.msra.mxu0 0.0
    %291 = vmatprep.subr.mxu0 0.0
    %292 = vmatpush1.msra.mxu0 0.0
    %293 = vmatprep.subr.mxu0 0.0
    %294 = vmatpush1.msra.mxu0 0.0
    %295 = vmatprep.subr.mxu0 0.0
    %296 = vmatpush1.msra.mxu0 0.0
    %297 = vmatprep.subr.mxu0 0.0
    %298 = vmatpush1.msra.mxu0 0.0
    %299 = vmatprep.subr.mxu0 0.0
    %300 = vmatpush1.msra.mxu0 0.0
    %301 = vmatprep.mubr.f32.mxu0 0.0
    %302 = vmatmul.mubr.f32.gmra.mrb[0].mxu0 %v92
    %v303 = vpop.f32.mrb[0].mxu0
    %v304 = vadd.f32 %v49, %v303
    %v305 = vpop.f32.mrb[0].mxu0
    %v306 = vadd.f32 %v49, %v305
    %307 = vmatprep.mubr.f32.mxu0 0.0
    %308 = vmatmul.mubr.f32.gmra.mrb[0].mxu0 %v95
    %v309 = vpop.f32.mrb[0].mxu0
    %v310 = vadd.f32 %v54, %v309
    %v311 = vpop.f32.mrb[0].mxu0
    %v312 = vadd.f32 %v54, %v311
    %313 = vmatprep.mubr.f32.mxu0 0.0
    %314 = vmatmul.mubr.f32.gmra.mrb[0].mxu0 %v98
    %v315 = vpop.f32.mrb[0].mxu0
    %v316 = vadd.f32 %v59, %v315
    %v317 = vpop.f32.mrb[0].mxu0
    %v318 = vadd.f32 %v59, %v317
    %319 = vmatprep.mubr.f32.mxu0 0.0
    %320 = vmatmul.mubr.f32.gmra.mrb[0].mxu0 %v101
    %v321 = vpop.f32.mrb[0].mxu0
    %v322 = vadd.f32 %v64, %v321
    %v323 = vpop.f32.mrb[0].mxu0
    %v324 = vadd.f32 %v64, %v323
    %325 = vmatprep.mubr.f32.mxu0 0.0
    %326 = vmatmul.mubr.f32.gmra.mrb[0].mxu0 %v104
    %v327 = vpop.f32.mrb[0].mxu0
    %v328 = vadd.f32 %v69, %v327
    %v329 = vpop.f32.mrb[0].mxu0
    %v330 = vadd.f32 %v69, %v329
    %331 = vmatprep.mubr.f32.mxu0 0.0
    %332 = vmatmul.mubr.f32.gmra.mrb[0].mxu0 %v107
    %v333 = vpop.f32.mrb[0].mxu0
    %v334 = vadd.f32 %v74, %v333
    %v335 = vpop.f32.mrb[0].mxu0
    %v336 = vadd.f32 %v74, %v335
    %337 = vmatprep.mubr.f32.mxu0 0.0
    %338 = vmatmul.mubr.f32.gmra.mrb[0].mxu0 %v110
    %v339 = vpop.f32.mrb[0].mxu0
    %v340 = vadd.f32 %v79, %v339
    %v341 = vpop.f32.mrb[0].mxu0
    %v342 = vadd.f32 %v79, %v341
    %343 = vmatprep.mubr.f32.mxu0 0.0
    %344 = vmatmul.mubr.f32.gmra.mrb[0].mxu0 %v113
    %v345 = vpop.f32.mrb[0].mxu0
    %v346 = vadd.f32 %v84, %v345
    %v347 = vpop.f32.mrb[0].mxu0
    %v348 = vadd.f32 %v84, %v347
    %349 = vdwg.mxu0
    %v350 = vmax.f32 %v191, 0.0
    %v351 = vmax.f32 %v193, 0.0
    %v352 = vmax.f32 %v304, 0.0
    %v353 = vmax.f32 %v306, 0.0
    %v354 = vmax.f32 %v197, 0.0
    %v355 = vmax.f32 %v199, 0.0
    %v356 = vmax.f32 %v310, 0.0
    %v357 = vmax.f32 %v312, 0.0
    %v358 = vmax.f32 %v203, 0.0
    %v359 = vmax.f32 %v205, 0.0
    %v360 = vmax.f32 %v316, 0.0
    %v361 = vmax.f32 %v318, 0.0
    %v362 = vmax.f32 %v209, 0.0
    %v363 = vmax.f32 %v211, 0.0
    %v364 = vmax.f32 %v322, 0.0
    %v365 = vmax.f32 %v324, 0.0
    %v366 = vmax.f32 %v215, 0.0
    %v367 = vmax.f32 %v217, 0.0
    %v368 = vmax.f32 %v328, 0.0
    %v369 = vmax.f32 %v330, 0.0
    %v370 = vmax.f32 %v221, 0.0
    %v371 = vmax.f32 %v223, 0.0
    %v372 = vmax.f32 %v334, 0.0
    %v373 = vmax.f32 %v336, 0.0
    %v374 = vmax.f32 %v227, 0.0
    %v375 = vmax.f32 %v229, 0.0
    %v376 = vmax.f32 %v340, 0.0
    %v377 = vmax.f32 %v342, 0.0
    %v378 = vmax.f32 %v233, 0.0
    %v379 = vmax.f32 %v235, 0.0
    %v380 = vmax.f32 %v346, 0.0
    %v381 = vmax.f32 %v348, 0.0
    %v382 = vld [vmem:[%s3] sm:$0xff]
    %v383 = vld [vmem:[%s3 + $0x8] sm:$0xff]
    %v384 = vld [vmem:[%s3 + $0x10] sm:$0xff]
    %v385 = vld [vmem:[%s3 + $0x18] sm:$0xff]
    %v386 = vld [vmem:[%s3 + $0x20] sm:$0xff]
    %v387 = vld [vmem:[%s3 + $0x28] sm:$0xff]
    %v388 = vld [vmem:[%s3 + $0x30] sm:$0xff]
    %v389 = vld [vmem:[%s3 + $0x38] sm:$0xff]
    %v390 = vld [vmem:[%s4] sm:$0xff]
    %v391 = vld [vmem:[%s4 + $0x8] sm:$0xff]
    %v392 = vld [vmem:[%s4 + $0x10] sm:$0xff]
    %v393 = vld [vmem:[%s4 + $0x18] sm:$0xff]
    %v394 = vld [vmem:[%s4 + $0x20] sm:$0xff]
    %v395 = vld [vmem:[%s4 + $0x28] sm:$0xff]
    %v396 = vld [vmem:[%s4 + $0x30] sm:$0xff]
    %v397 = vld [vmem:[%s4 + $0x38] sm:$0xff]
    %399 = vset.pattern.permute.xlu0 0
    %400 = vperm.xlu0 %399, %v390
    %v401 = vpop.permute.xlu0 %400
    %404 = vset.pattern.permute.xlu0 0
    %405 = vperm.xlu0 %404, %v391
    %v406 = vpop.permute.xlu0 %405
    %409 = vset.pattern.permute.xlu0 0
    %410 = vperm.xlu0 %409, %v392
    %v411 = vpop.permute.xlu0 %410
    %414 = vset.pattern.permute.xlu0 0
    %415 = vperm.xlu0 %414, %v393
    %v416 = vpop.permute.xlu0 %415
    %419 = vset.pattern.permute.xlu0 0
    %420 = vperm.xlu0 %419, %v394
    %v421 = vpop.permute.xlu0 %420
    %424 = vset.pattern.permute.xlu0 0
    %425 = vperm.xlu0 %424, %v395
    %v426 = vpop.permute.xlu0 %425
    %429 = vset.pattern.permute.xlu0 0
    %430 = vperm.xlu0 %429, %v396
    %v431 = vpop.permute.xlu0 %430
    %434 = vset.pattern.permute.xlu0 0
    %435 = vperm.xlu0 %434, %v397
    %v436 = vpop.permute.xlu0 %435
    %vm438 = vcmask 523264
    %v440 = vsel %vm438, %v382, 0
    %v443 = vsel %vm438, %v383, 0
    %v446 = vsel %vm438, %v384, 0
    %v449 = vsel %vm438, %v385, 0
    %v452 = vsel %vm438, %v386, 0
    %v455 = vsel %vm438, %v387, 0
    %v458 = vsel %vm438, %v388, 0
    %v461 = vsel %vm438, %v389, 0
    %463 = vmatprep.subr.mxu0 %v351
    %464 = vmatpush1.msra.mxu0 %v350
    %465 = vmatprep.subr.mxu0 %v355
    %466 = vmatpush1.msra.mxu0 %v354
    %467 = vmatprep.subr.mxu0 %v359
    %468 = vmatpush1.msra.mxu0 %v358
    %469 = vmatprep.subr.mxu0 %v363
    %470 = vmatpush1.msra.mxu0 %v362
    %471 = vmatprep.subr.mxu0 %v367
    %472 = vmatpush1.msra.mxu0 %v366
    %473 = vmatprep.subr.mxu0 %v371
    %474 = vmatpush1.msra.mxu0 %v370
    %475 = vmatprep.subr.mxu0 %v375
    %476 = vmatpush1.msra.mxu0 %v374
    %477 = vmatprep.subr.mxu0 %v379
    %478 = vmatpush1.msra.mxu0 %v378
    %479 = vmatprep.subr.mxu0 0.0
    %480 = vmatpush1.msra.mxu0 0.0
    %481 = vmatprep.subr.mxu0 0.0
    %482 = vmatpush1.msra.mxu0 0.0
    %483 = vmatprep.subr.mxu0 0.0
    %484 = vmatpush1.msra.mxu0 0.0
    %485 = vmatprep.subr.mxu0 0.0
    %486 = vmatpush1.msra.mxu0 0.0
    %487 = vmatprep.subr.mxu0 0.0
    %488 = vmatpush1.msra.mxu0 0.0
    %489 = vmatprep.subr.mxu0 0.0
    %490 = vmatpush1.msra.mxu0 0.0
    %491 = vmatprep.subr.mxu0 0.0
    %492 = vmatpush1.msra.mxu0 0.0
    %493 = vmatprep.subr.mxu0 0.0
    %494 = vmatpush1.msra.mxu0 0.0
    %495 = vmatprep.subr.mxu0 0.0
    %496 = vmatpush1.msra.mxu0 0.0
    %497 = vmatprep.subr.mxu0 0.0
    %498 = vmatpush1.msra.mxu0 0.0
    %499 = vmatprep.subr.mxu0 0.0
    %500 = vmatpush1.msra.mxu0 0.0
    %501 = vmatprep.subr.mxu0 0.0
    %502 = vmatpush1.msra.mxu0 0.0
    %503 = vmatprep.subr.mxu0 0.0
    %504 = vmatpush1.msra.mxu0 0.0
    %505 = vmatprep.subr.mxu0 0.0
    %506 = vmatpush1.msra.mxu0 0.0
    %507 = vmatprep.subr.mxu0 0.0
    %508 = vmatpush1.msra.mxu0 0.0
    %509 = vmatprep.subr.mxu0 0.0
    %510 = vmatpush1.msra.mxu0 0.0
    %511 = vmatprep.subr.mxu0 0.0
    %512 = vmatpush1.msra.mxu0 0.0
    %513 = vmatprep.subr.mxu0 0.0
    %514 = vmatpush1.msra.mxu0 0.0
    %515 = vmatprep.subr.mxu0 0.0
    %516 = vmatpush1.msra.mxu0 0.0
    %517 = vmatprep.subr.mxu0 0.0
    %518 = vmatpush1.msra.mxu0 0.0
    %519 = vmatprep.subr.mxu0 0.0
    %520 = vmatpush1.msra.mxu0 0.0
    %521 = vmatprep.subr.mxu0 0.0
    %522 = vmatpush1.msra.mxu0 0.0
    %523 = vmatprep.subr.mxu0 0.0
    %524 = vmatpush1.msra.mxu0 0.0
    %525 = vmatprep.subr.mxu0 0.0
    %526 = vmatpush1.msra.mxu0 0.0
    %527 = vmatprep.mubr.f32.mxu0 0.0
    %528 = vmatmul.mubr.f32.gmra.mrb[0].mxu0 %v440
    %v529 = vpop.f32.mrb[0].mxu0
    %v530 = vadd.f32 %v401, %v529
    %v531 = vpop.f32.mrb[0].mxu0
    %v532 = vadd.f32 %v401, %v531
    %533 = vmatprep.mubr.f32.mxu0 0.0
    %534 = vmatmul.mubr.f32.gmra.mrb[0].mxu0 %v443
    %v535 = vpop.f32.mrb[0].mxu0
    %v536 = vadd.f32 %v406, %v535
    %v537 = vpop.f32.mrb[0].mxu0
    %v538 = vadd.f32 %v406, %v537
    %539 = vmatprep.mubr.f32.mxu0 0.0
    %540 = vmatmul.mubr.f32.gmra.mrb[0].mxu0 %v446
    %v541 = vpop.f32.mrb[0].mxu0
    %v542 = vadd.f32 %v411, %v541
    %v543 = vpop.f32.mrb[0].mxu0
    %v544 = vadd.f32 %v411, %v543
    %545 = vmatprep.mubr.f32.mxu0 0.0
    %546 = vmatmul.mubr.f32.gmra.mrb[0].mxu0 %v449
    %v547 = vpop.f32.mrb[0].mxu0
    %v548 = vadd.f32 %v416, %v547
    %v549 = vpop.f32.mrb[0].mxu0
    %v550 = vadd.f32 %v416, %v549
    %551 = vmatprep.mubr.f32.mxu0 0.0
    %552 = vmatmul.mubr.f32.gmra.mrb[0].mxu0 %v452
    %v553 = vpop.f32.mrb[0].mxu0
    %v554 = vadd.f32 %v421, %v553
    %v555 = vpop.f32.mrb[0].mxu0
    %v556 = vadd.f32 %v421, %v555
    %557 = vmatprep.mubr.f32.mxu0 0.0
    %558 = vmatmul.mubr.f32.gmra.mrb[0].mxu0 %v455
    %v559 = vpop.f32.mrb[0].mxu0
    %v560 = vadd.f32 %v426, %v559
    %v561 = vpop.f32.mrb[0].mxu0
    %v562 = vadd.f32 %v426, %v561
    %563 = vmatprep.mubr.f32.mxu0 0.0
    %564 = vmatmul.mubr.f32.gmra.mrb[0].mxu0 %v458
    %v565 = vpop.f32.mrb[0].mxu0
    %v566 = vadd.f32 %v431, %v565
    %v567 = vpop.f32.mrb[0].mxu0
    %v568 = vadd.f32 %v431, %v567
    %569 = vmatprep.mubr.f32.mxu0 0.0
    %570 = vmatmul.mubr.f32.gmra.mrb[0].mxu0 %v461
    %v571 = vpop.f32.mrb[0].mxu0
    %v572 = vadd.f32 %v436, %v571
    %v573 = vpop.f32.mrb[0].mxu0
    %v574 = vadd.f32 %v436, %v573
    %575 = vdwg.mxu0
    %576 = vmatprep.subr.mxu0 %v353
    %577 = vmatpush1.msra.mxu0 %v352
    %578 = vmatprep.subr.mxu0 %v357
    %579 = vmatpush1.msra.mxu0 %v356
    %580 = vmatprep.subr.mxu0 %v361
    %581 = vmatpush1.msra.mxu0 %v360
    %582 = vmatprep.subr.mxu0 %v365
    %583 = vmatpush1.msra.mxu0 %v364
    %584 = vmatprep.subr.mxu0 %v369
    %585 = vmatpush1.msra.mxu0 %v368
    %586 = vmatprep.subr.mxu0 %v373
    %587 = vmatpush1.msra.mxu0 %v372
    %588 = vmatprep.subr.mxu0 %v377
    %589 = vmatpush1.msra.mxu0 %v376
    %590 = vmatprep.subr.mxu0 %v381
    %591 = vmatpush1.msra.mxu0 %v380
    %592 = vmatprep.subr.mxu0 0.0
    %593 = vmatpush1.msra.mxu0 0.0
    %594 = vmatprep.subr.mxu0 0.0
    %595 = vmatpush1.msra.mxu0 0.0
    %596 = vmatprep.subr.mxu0 0.0
    %597 = vmatpush1.msra.mxu0 0.0
    %598 = vmatprep.subr.mxu0 0.0
    %599 = vmatpush1.msra.mxu0 0.0
    %600 = vmatprep.subr.mxu0 0.0
    %601 = vmatpush1.msra.mxu0 0.0
    %602 = vmatprep.subr.mxu0 0.0
    %603 = vmatpush1.msra.mxu0 0.0
    %604 = vmatprep.subr.mxu0 0.0
    %605 = vmatpush1.msra.mxu0 0.0
    %606 = vmatprep.subr.mxu0 0.0
    %607 = vmatpush1.msra.mxu0 0.0
    %608 = vmatprep.subr.mxu0 0.0
    %609 = vmatpush1.msra.mxu0 0.0
    %610 = vmatprep.subr.mxu0 0.0
    %611 = vmatpush1.msra.mxu0 0.0
    %612 = vmatprep.subr.mxu0 0.0
    %613 = vmatpush1.msra.mxu0 0.0
    %614 = vmatprep.subr.mxu0 0.0
    %615 = vmatpush1.msra.mxu0 0.0
    %616 = vmatprep.subr.mxu0 0.0
    %617 = vmatpush1.msra.mxu0 0.0
    %618 = vmatprep.subr.mxu0 0.0
    %619 = vmatpush1.msra.mxu0 0.0
    %620 = vmatprep.subr.mxu0 0.0
    %621 = vmatpush1.msra.mxu0 0.0
    %622 = vmatprep.subr.mxu0 0.0
    %623 = vmatpush1.msra.mxu0 0.0
    %624 = vmatprep.subr.mxu0 0.0
    %625 = vmatpush1.msra.mxu0 0.0
    %626 = vmatprep.subr.mxu0 0.0
    %627 = vmatpush1.msra.mxu0 0.0
    %628 = vmatprep.subr.mxu0 0.0
    %629 = vmatpush1.msra.mxu0 0.0
    %630 = vmatprep.subr.mxu0 0.0
    %631 = vmatpush1.msra.mxu0 0.0
    %632 = vmatprep.subr.mxu0 0.0
    %633 = vmatpush1.msra.mxu0 0.0
    %634 = vmatprep.subr.mxu0 0.0
    %635 = vmatpush1.msra.mxu0 0.0
    %636 = vmatprep.subr.mxu0 0.0
    %637 = vmatpush1.msra.mxu0 0.0
    %638 = vmatprep.subr.mxu0 0.0
    %639 = vmatpush1.msra.mxu0 0.0
    %640 = vmatprep.mubr.f32.mxu0 0.0
    %641 = vmatmul.mubr.f32.gmra.mrb[0].mxu0 %v440
    %v642 = vpop.f32.mrb[0].mxu0
    %v643 = vadd.f32 %v401, %v642
    %v644 = vpop.f32.mrb[0].mxu0
    %v645 = vadd.f32 %v401, %v644
    %646 = vmatprep.mubr.f32.mxu0 0.0
    %647 = vmatmul.mubr.f32.gmra.mrb[0].mxu0 %v443
    %v648 = vpop.f32.mrb[0].mxu0
    %v649 = vadd.f32 %v406, %v648
    %v650 = vpop.f32.mrb[0].mxu0
    %v651 = vadd.f32 %v406, %v650
    %652 = vmatprep.mubr.f32.mxu0 0.0
    %653 = vmatmul.mubr.f32.gmra.mrb[0].mxu0 %v446
    %v654 = vpop.f32.mrb[0].mxu0
    %v655 = vadd.f32 %v411, %v654
    %v656 = vpop.f32.mrb[0].mxu0
    %v657 = vadd.f32 %v411, %v656
    %658 = vmatprep.mubr.f32.mxu0 0.0
    %659 = vmatmul.mubr.f32.gmra.mrb[0].mxu0 %v449
    %v660 = vpop.f32.mrb[0].mxu0
    %v661 = vadd.f32 %v416, %v660
    %v662 = vpop.f32.mrb[0].mxu0
    %v663 = vadd.f32 %v416, %v662
    %664 = vmatprep.mubr.f32.mxu0 0.0
    %665 = vmatmul.mubr.f32.gmra.mrb[0].mxu0 %v452
    %v666 = vpop.f32.mrb[0].mxu0
    %v667 = vadd.f32 %v421, %v666
    %v668 = vpop.f32.mrb[0].mxu0
    %v669 = vadd.f32 %v421, %v668
    %670 = vmatprep.mubr.f32.mxu0 0.0
    %671 = vmatmul.mubr.f32.gmra.mrb[0].mxu0 %v455
    %v672 = vpop.f32.mrb[0].mxu0
    %v673 = vadd.f32 %v426, %v672
    %v674 = vpop.f32.mrb[0].mxu0
    %v675 = vadd.f32 %v426, %v674
    %676 = vmatprep.mubr.f32.mxu0 0.0
    %677 = vmatmul.mubr.f32.gmra.mrb[0].mxu0 %v458
    %v678 = vpop.f32.mrb[0].mxu0
    %v679 = vadd.f32 %v431, %v678
    %v680 = vpop.f32.mrb[0].mxu0
    %v681 = vadd.f32 %v431, %v680
    %682 = vmatprep.mubr.f32.mxu0 0.0
    %683 = vmatmul.mubr.f32.gmra.mrb[0].mxu0 %v461
    %v684 = vpop.f32.mrb[0].mxu0
    %v685 = vadd.f32 %v436, %v684
    %v686 = vpop.f32.mrb[0].mxu0
    %v687 = vadd.f32 %v436, %v686
    %688 = vdwg.mxu0
    %v689 = vmax.f32 %v530, 0.0
    %v690 = vmax.f32 %v532, 0.0
    %v691 = vmax.f32 %v643, 0.0
    %v692 = vmax.f32 %v645, 0.0
    %v693 = vmax.f32 %v536, 0.0
    %v694 = vmax.f32 %v538, 0.0
    %v695 = vmax.f32 %v649, 0.0
    %v696 = vmax.f32 %v651, 0.0
    %v697 = vmax.f32 %v542, 0.0
    %v698 = vmax.f32 %v544, 0.0
    %v699 = vmax.f32 %v655, 0.0
    %v700 = vmax.f32 %v657, 0.0
    %v701 = vmax.f32 %v548, 0.0
    %v702 = vmax.f32 %v550, 0.0
    %v703 = vmax.f32 %v661, 0.0
    %v704 = vmax.f32 %v663, 0.0
    %v705 = vmax.f32 %v554, 0.0
    %v706 = vmax.f32 %v556, 0.0
    %v707 = vmax.f32 %v667, 0.0
    %v708 = vmax.f32 %v669, 0.0
    %v709 = vmax.f32 %v560, 0.0
    %v710 = vmax.f32 %v562, 0.0
    %v711 = vmax.f32 %v673, 0.0
    %v712 = vmax.f32 %v675, 0.0
    %v713 = vmax.f32 %v566, 0.0
    %v714 = vmax.f32 %v568, 0.0
    %v715 = vmax.f32 %v679, 0.0
    %v716 = vmax.f32 %v681, 0.0
    %v717 = vmax.f32 %v572, 0.0
    %v718 = vmax.f32 %v574, 0.0
    %v719 = vmax.f32 %v685, 0.0
    %v720 = vmax.f32 %v687, 0.0
    %v721 = vld [vmem:[%s5] sm:$0xff]
    %v722 = vld [vmem:[%s5 + $0x8] sm:$0xff]
    %v723 = vld [vmem:[%s5 + $0x10] sm:$0xff]
    %v724 = vld [vmem:[%s5 + $0x18] sm:$0xff]
    %v725 = vld [vmem:[%s5 + $0x20] sm:$0xff]
    %v726 = vld [vmem:[%s5 + $0x28] sm:$0xff]
    %v727 = vld [vmem:[%s5 + $0x30] sm:$0xff]
    %v728 = vld [vmem:[%s5 + $0x38] sm:$0xff]
    %730 = vset.pattern.permute.xlu0 0
    %731 = vperm.xlu0 %730, %v721
    %v732 = vpop.permute.xlu0 %731
    %735 = vset.pattern.permute.xlu0 0
    %736 = vperm.xlu0 %735, %v722
    %v737 = vpop.permute.xlu0 %736
    %740 = vset.pattern.permute.xlu0 0
    %741 = vperm.xlu0 %740, %v723
    %v742 = vpop.permute.xlu0 %741
    %745 = vset.pattern.permute.xlu0 0
    %746 = vperm.xlu0 %745, %v724
    %v747 = vpop.permute.xlu0 %746
    %750 = vset.pattern.permute.xlu0 0
    %751 = vperm.xlu0 %750, %v725
    %v752 = vpop.permute.xlu0 %751
    %755 = vset.pattern.permute.xlu0 0
    %756 = vperm.xlu0 %755, %v726
    %v757 = vpop.permute.xlu0 %756
    %760 = vset.pattern.permute.xlu0 0
    %761 = vperm.xlu0 %760, %v727
    %v762 = vpop.permute.xlu0 %761
    %765 = vset.pattern.permute.xlu0 0
    %766 = vperm.xlu0 %765, %v728
    %v767 = vpop.permute.xlu0 %766
    %v769 = vmul.f32 %v689, %v732
    %v770 = vmul.f32 %v690, %v732
    %v771 = vmul.f32 %v691, %v732
    %v772 = vmul.f32 %v692, %v732
    %v773 = vmul.f32 %v693, %v737
    %v774 = vmul.f32 %v694, %v737
    %v775 = vmul.f32 %v695, %v737
    %v776 = vmul.f32 %v696, %v737
    %v777 = vmul.f32 %v697, %v742
    %v778 = vmul.f32 %v698, %v742
    %v779 = vmul.f32 %v699, %v742
    %v780 = vmul.f32 %v700, %v742
    %v781 = vmul.f32 %v701, %v747
    %v782 = vmul.f32 %v702, %v747
    %v783 = vmul.f32 %v703, %v747
    %v784 = vmul.f32 %v704, %v747
    %v785 = vmul.f32 %v705, %v752
    %v786 = vmul.f32 %v706, %v752
    %v787 = vmul.f32 %v707, %v752
    %v788 = vmul.f32 %v708, %v752
    %v789 = vmul.f32 %v709, %v757
    %v790 = vmul.f32 %v710, %v757
    %v791 = vmul.f32 %v711, %v757
    %v792 = vmul.f32 %v712, %v757
    %v793 = vmul.f32 %v713, %v762
    %v794 = vmul.f32 %v714, %v762
    %v795 = vmul.f32 %v715, %v762
    %v796 = vmul.f32 %v716, %v762
    %v797 = vmul.f32 %v717, %v767
    %v798 = vmul.f32 %v718, %v767
    %v799 = vmul.f32 %v719, %v767
    %v800 = vmul.f32 %v720, %v767
    %v801 = vadd.f32 %v769, %v773
    %v802 = vadd.f32 %v801, %v777
    %v803 = vadd.f32 %v802, %v781
    %v804 = vadd.f32 %v803, %v785
    %v805 = vadd.f32 %v804, %v789
    %v806 = vadd.f32 %v805, %v793
    %v807 = vadd.f32 %v806, %v797
    %v808 = vrot.slane %v807, 4
    %v809 = vadd.f32 %v807, %v808
    %v810 = vrot.slane %v809, 2
    %v811 = vadd.f32 %v809, %v810
    %v812 = vrot.slane %v811, 1
    %v813 = vadd.f32 %v811, %v812
    %v814 = vadd.f32 %v770, %v774
    %v815 = vadd.f32 %v814, %v778
    %v816 = vadd.f32 %v815, %v782
    %v817 = vadd.f32 %v816, %v786
    %v818 = vadd.f32 %v817, %v790
    %v819 = vadd.f32 %v818, %v794
    %v820 = vadd.f32 %v819, %v798
    %v821 = vrot.slane %v820, 4
    %v822 = vadd.f32 %v820, %v821
    %v823 = vrot.slane %v822, 2
    %v824 = vadd.f32 %v822, %v823
    %v825 = vrot.slane %v824, 1
    %v826 = vadd.f32 %v824, %v825
    %v827 = vadd.f32 %v771, %v775
    %v828 = vadd.f32 %v827, %v779
    %v829 = vadd.f32 %v828, %v783
    %v830 = vadd.f32 %v829, %v787
    %v831 = vadd.f32 %v830, %v791
    %v832 = vadd.f32 %v831, %v795
    %v833 = vadd.f32 %v832, %v799
    %v834 = vrot.slane %v833, 4
    %v835 = vadd.f32 %v833, %v834
    %v836 = vrot.slane %v835, 2
    %v837 = vadd.f32 %v835, %v836
    %v838 = vrot.slane %v837, 1
    %v839 = vadd.f32 %v837, %v838
    %v840 = vadd.f32 %v772, %v776
    %v841 = vadd.f32 %v840, %v780
    %v842 = vadd.f32 %v841, %v784
    %v843 = vadd.f32 %v842, %v788
    %v844 = vadd.f32 %v843, %v792
    %v845 = vadd.f32 %v844, %v796
    %v846 = vadd.f32 %v845, %v800
    %v847 = vrot.slane %v846, 4
    %v848 = vadd.f32 %v846, %v847
    %v849 = vrot.slane %v848, 2
    %v850 = vadd.f32 %v848, %v849
    %v851 = vrot.slane %v850, 1
    %v852 = vadd.f32 %v850, %v851
    %s853 = sld [smem:[#allocation2]]
    %v854 = vstv %s853
    %v855 = vadd.f32 %v813, %v854
    %v856 = vadd.f32 %v826, %v854
    %v857 = vadd.f32 %v839, %v854
    %v858 = vadd.f32 %v852, %v854
    %v863 = vcombine.low %v855, %v856
    %v864 = vcombine.low %v857, %v858
    %v866 = vunpack.c.l.s4 1966171168
    %v867 = vunpack.c.0.s8 %v866
    %v868 = vlaneseq
    %v869 = vshrl.u32 %v868, 7
    %v870 = vsub.s32 %v867, %v869
    %v871 = vrot.slane %v863, %v870
    %v873 = vunpack.c.l.s4 1966171168
    %v874 = vunpack.c.0.s8 %v873
    %v875 = vlaneseq
    %v876 = vshrl.u32 %v875, 7
    %v877 = vsub.s32 %v874, %v876
    %v878 = vrot.slane %v864, %v877
    %v879 = vcombine.low %v871, %v878
    %v881 = vunpack.c.l.s4 1966171168
    %v882 = vunpack.c.0.s8 %v881
    %v883 = vlaneseq
    %v884 = vshrl.u32 %v883, 7
    %v885 = vsub.s32 %v882, %v884
    %v886 = vrot.slane %v879, %v885
    %v888 = vlaneseq
    %vm889 = vcmp.ge.s32.totalorder %v888, 0
    %vm890 = vcmp.lt.s32.totalorder %v888, 512
    %vm891 = vmand %vm889, %vm890
    %892 = vst.msk [vmem:[#allocation3] sm:$0xf] %vm891, %v886
    // Predicated region
    $region30: #{tpu_custom_call.1} parent=1 // pred_check
      _
    $region31: #{tpu_custom_call.1} parent=1 // pred_check_branch
      %894 = sbr.rel (0) target = $region33
    $region32: #{tpu_custom_call.1} parent=1 // pred_region
      %s896 = ssub.s32 64, 64
      %897 = vsyncadd [#allocation4], %s896
      %s899 = sshll.u32 [#allocation3], 4
      %s900 = int_to_ptr.vmem [resolvable:$true] %s899
      %902 = dma.vmem_to_hbm [thread:$0]  %s900, 64, %s7, [#allocation4]
    $region33: #{tpu_custom_call.1} parent=1 // pred_fallthru
      _
    // Predicated region
    $region34: #{tpu_custom_call.1} parent=1 // pred_check
      _
    $region35: #{tpu_custom_call.1} parent=1 // pred_check_branch
      %904 = sbr.rel (0) target = $region37
    $region36: #{tpu_custom_call.1} parent=1 // pred_region
      %905 = dma.done [#allocation4], 64
    $region37: #{tpu_custom_call.1} parent=1 // pred_fallthru
      _
    %906 = vsyncpa [#allocation4], 1

</llo_original>
